<compile_context>
chip_gen: v5e
topology: v5e:2x2
jax: 0.10.0
libtpu: 0.0.40
codegen_flags: <defaults>
</compile_context>

<pallas_src>
import functools

import jax
import jax.numpy as jnp
from jax import lax
from jax.experimental import pallas as pl
from jax.experimental.pallas import tpu as pltpu


def _fag_predict_kernel(p_ref, w1t_ref, b1_ref, w2p_ref, b2p_ref, o_ref, *,
                        inv_hw, batch):
    """Single grid-less invocation; processes the whole (tiny) batch.

    p_ref  : (B, K, HW)    im2col patches, bf16, native [B, K, HW] layout
    w1t_ref: (Cout, K)     conv weight, pre-transposed, bf16
    b1_ref : (Cout, 1)     conv bias, f32
    w2p_ref: (Cout, NCp)   classifier weight, lane-padded to NCp (mult of 128), f32
    b2p_ref: (1, NCp)      classifier bias, lane-padded, f32
    o_ref  : (B, NCp)      padded logits
    """
    # Hoist resident-parameter reads above the MXU dots (loads overlap MXU latency).
    w1t = w1t_ref[...]                                                 # [Cout, K]
    b1 = b1_ref[...]                                                   # [Cout, 1]
    w2p = w2p_ref[...]                                                 # [Cout, NCp]
    b2p = b2p_ref[...]                                                 # [1, NCp]

    for b in range(batch):                      # static loop, B is tiny & static
        p = p_ref[b]                                                   # [K, HW] bf16
        # conv-as-matmul (MXU), bf16 operands, f32 accumulate: [Cout, HW]
        h = jnp.dot(w1t, p, preferred_element_type=jnp.float32)
        h = jnp.maximum(h + b1, 0.0)                                   # bias + ReLU (f32, VPU)
        # global average pool over the spatial (lane) axis -> [Cout, 1]  (XLU)
        feat = jnp.sum(h, axis=1, keepdims=True) * inv_hw
        # tiny classifier: broadcast-mul + sublane reduce (no transpose, no 2nd dot)
        logits = jnp.sum(feat * w2p, axis=0, keepdims=True) + b2p      # [1, NCp]
        o_ref[pl.ds(b, 1), :] = logits                                 # lane-dense store


def make_predict(w1, b1, w2, b2):
    """w1: [C*9, hidden], b1: [hidden], w2: [hidden, num_classes], b2: [num_classes].

    Parameter re-layouts happen once here (next to the weights), not per forward.
    Returns a jitted predict(x) with x: [B, C, H, W] (NCHW).
    """
    K, Cout = w1.shape
    NC = w2.shape[1]
    NCp = pl.cdiv(NC, 128) * 128              # lane-pad classifier output to 128

    # One-time tiny parameter re-layouts (hoisted out of the forward path).
    w1t = jnp.asarray(w1, jnp.float32).T.astype(jnp.bfloat16)          # [Cout, K]
    b1c = jnp.asarray(b1, jnp.float32).reshape(Cout, 1)                # [Cout, 1]
    w2p = jnp.zeros((Cout, NCp), jnp.float32).at[:, :NC].set(
        jnp.asarray(w2, jnp.float32))                                  # [Cout, NCp]
    b2p = jnp.zeros((1, NCp), jnp.float32).at[:, :NC].set(
        jnp.asarray(b2, jnp.float32).reshape(1, NC))                   # [1, NCp]

    vmem_spec = pl.BlockSpec(memory_space=pltpu.MemorySpace.VMEM)

    @jax.jit
    def predict(x):
        B, C, H, W = x.shape
        HW = H * W
        assert C * 9 == K, "conv weight K must equal C*3*3"

        # im2col glue is fused under the same jit as the kernel call (no separate
        # dispatch).  Native layout stays [B, K, HW] (contiguous reshape only, no
        # transpose of the 9x slab), cast to bf16 to halve its HBM bytes.
        # TODO(synk): if w1 comes from a real PyTorch Conv2d, its [Cout,C,3,3]
        # flattening must match conv_general_dilated_patches' feature ordering.
        patches = lax.conv_general_dilated_patches(
            x.astype(jnp.float32), filter_shape=(3, 3),
            window_strides=(1, 1), padding="SAME")                     # [B, K, H, W]
        p = patches.reshape(B, K, HW).astype(jnp.bfloat16)             # [B, K, HW]

        kernel = functools.partial(_fag_predict_kernel,
                                   inv_hw=1.0 / float(HW), batch=B)
        ce = pl.CostEstimate(
            flops=2 * B * Cout * K * HW + 2 * B * Cout * NCp,
            transcendentals=0,
            bytes_accessed=(B * K * HW * 2            # bf16 patches
                            + Cout * K * 2            # bf16 conv weight
                            + Cout * 4                # conv bias
                            + Cout * NCp * 4          # padded classifier weight
                            + NCp * 4                 # padded classifier bias
                            + B * NCp * 4),           # padded logits out
        )

        out = pl.pallas_call(
            kernel,
            out_shape=jax.ShapeDtypeStruct((B, NCp), jnp.float32),
            in_specs=[vmem_spec] * 5,      # everything fits trivially in VMEM
            out_specs=vmem_spec,
            cost_estimate=ce,
        )(p, w1t, b1c, w2p, b2p)

        return out[:, :NC]

    return predict


def _predict_ref(x, w1, b1, w2, b2):
    """Pure-JAX f32 reference for correctness checking."""
    B, C, H, W = x.shape
    K, Cout = w1.shape
    HW = H * W
    patches = lax.conv_general_dilated_patches(
        x, filter_shape=(3, 3), window_strides=(1, 1), padding="SAME")
    p = patches.reshape(B, K, HW).astype(jnp.float32)                  # [B, K, HW]
    h = jnp.einsum("bkh,kc->bch", p, w1) + b1[None, :, None]           # [B, Cout, HW]
    h = jnp.maximum(h, 0.0)
    feat = jnp.mean(h, axis=-1)                                        # [B, Cout]
    return feat @ w2 + b2[None, :]                                     # [B, NC]


if __name__ == "__main__":
    # Small shapes consistent with the module: input_shape=(4,16,16), num_classes=8
    B, C, H, W = 2, 4, 16, 16
    hidden = 32
    num_classes = 8
    K = C * 3 * 3

    key = jax.random.PRNGKey(0)
    kx, k1, kb1, k2, kb2 = jax.random.split(key, 5)

    x = jax.random.normal(kx, (B, C, H, W), dtype=jnp.float32)
    w1 = jax.random.normal(k1, (K, hidden), dtype=jnp.float32) * 0.1
    b1 = jax.random.normal(kb1, (hidden,), dtype=jnp.float32) * 0.01
    w2 = jax.random.normal(k2, (hidden, num_classes), dtype=jnp.float32) * 0.1
    b2 = jax.random.normal(kb2, (num_classes,), dtype=jnp.float32) * 0.01

    predict = make_predict(w1, b1, w2, b2)
    logits = predict(x)
    jax.block_until_ready(logits)

    assert logits.shape == (B, num_classes)
    assert bool(jnp.all(jnp.isfinite(logits)))

    ref = _predict_ref(x, w1, b1, w2, b2)
    assert bool(jnp.allclose(logits, ref, rtol=1e-2, atol=1e-2))

    print("KERNEL_OK")
</pallas_src>

<mosaic_0001>
module attributes {stable_mosaic.version = 11 : i64} {
  func.func @_fag_predict_kernel(%arg0: memref<2x36x256xbf16, #tpu.memory_space<vmem>>, %arg1: memref<32x36xbf16, #tpu.memory_space<vmem>>, %arg2: memref<32x1xf32, #tpu.memory_space<vmem>>, %arg3: memref<32x128xf32, #tpu.memory_space<vmem>>, %arg4: memref<1x128xf32, #tpu.memory_space<vmem>>, %arg5: memref<2x128xf32, #tpu.memory_space<vmem>>) attributes {dimension_semantics = [], scalar_prefetch = 0 : i64, scratch_operands = 0 : i64, tpu.core_type = #tpu.core_type<tc>} {
    %c0 = arith.constant 0 : index
    %c0_0 = arith.constant 0 : index
    %0 = vector.load %arg1[%c0, %c0_0] : memref<32x36xbf16, #tpu.memory_space<vmem>>, vector<32x36xbf16>
    %c0_1 = arith.constant 0 : index
    %c0_2 = arith.constant 0 : index
    %1 = vector.load %arg2[%c0_1, %c0_2] : memref<32x1xf32, #tpu.memory_space<vmem>>, vector<32x1xf32>
    %c0_3 = arith.constant 0 : index
    %c0_4 = arith.constant 0 : index
    %2 = vector.load %arg3[%c0_3, %c0_4] : memref<32x128xf32, #tpu.memory_space<vmem>>, vector<32x128xf32>
    %c0_5 = arith.constant 0 : index
    %c0_6 = arith.constant 0 : index
    %3 = vector.load %arg4[%c0_5, %c0_6] : memref<1x128xf32, #tpu.memory_space<vmem>>, vector<1x128xf32>
    %c0_7 = arith.constant 0 : index
    %c0_8 = arith.constant 0 : index
    %c0_9 = arith.constant 0 : index
    %4 = vector.load %arg0[%c0_7, %c0_8, %c0_9] : memref<2x36x256xbf16, #tpu.memory_space<vmem>>, vector<1x36x256xbf16>
    %5 = vector.shape_cast %4 : vector<1x36x256xbf16> to vector<36x256xbf16>
    %cst = arith.constant dense<0.000000e+00> : vector<32x256xf32>
    %6 = tpu.matmul %0, %5, %cst {dimension_numbers = #tpu.dot_dimension_numbers<[1], [0], [0], [1], [0, 0, 1, 1], [], []>} : vector<32x36xbf16>, vector<36x256xbf16>, vector<32x256xf32> -> vector<32x256xf32>
    %7 = vector.broadcast %1 : vector<32x1xf32> to vector<32x256xf32>
    %8 = arith.addf %6, %7 : vector<32x256xf32>
    %cst_10 = arith.constant 0.000000e+00 : f32
    %9 = vector.broadcast %cst_10 : f32 to vector<32x256xf32>
    %10 = arith.maximumf %8, %9 : vector<32x256xf32>
    %cst_11 = arith.constant dense<0.000000e+00> : vector<32xf32>
    %11 = vector.multi_reduction <add>, %10, %cst_11 [1] : vector<32x256xf32> to vector<32xf32>
    %12 = vector.shape_cast %11 : vector<32xf32> to vector<32x1xf32>
    %cst_12 = arith.constant 3.906250e-03 : f32
    %13 = vector.broadcast %cst_12 : f32 to vector<32x1xf32>
    %14 = arith.mulf %12, %13 : vector<32x1xf32>
    %15 = vector.broadcast %14 : vector<32x1xf32> to vector<32x128xf32>
    %16 = arith.mulf %15, %2 : vector<32x128xf32>
    %cst_13 = arith.constant dense<0.000000e+00> : vector<128xf32>
    %17 = vector.multi_reduction <add>, %16, %cst_13 [0] : vector<32x128xf32> to vector<128xf32>
    %18 = vector.shape_cast %17 : vector<128xf32> to vector<1x128xf32>
    %19 = arith.addf %18, %3 : vector<1x128xf32>
    %c0_14 = arith.constant 0 : index
    %c0_15 = arith.constant 0 : index
    %20 = vector.load %arg5[%c0_14, %c0_15] : memref<2x128xf32, #tpu.memory_space<vmem>>, vector<1x128xf32>
    tpu.vector_store %arg5[%c0_14, %c0_15], %19 {strides = array<i32>} : memref<2x128xf32, #tpu.memory_space<vmem>>, vector<1x128xf32>,
    %c1 = arith.constant 1 : index
    %c0_16 = arith.constant 0 : index
    %c0_17 = arith.constant 0 : index
    %21 = vector.load %arg0[%c1, %c0_16, %c0_17] : memref<2x36x256xbf16, #tpu.memory_space<vmem>>, vector<1x36x256xbf16>
    %22 = vector.shape_cast %21 : vector<1x36x256xbf16> to vector<36x256xbf16>
    %cst_18 = arith.constant dense<0.000000e+00> : vector<32x256xf32>
    %23 = tpu.matmul %0, %22, %cst_18 {dimension_numbers = #tpu.dot_dimension_numbers<[1], [0], [0], [1], [0, 0, 1, 1], [], []>} : vector<32x36xbf16>, vector<36x256xbf16>, vector<32x256xf32> -> vector<32x256xf32>
    %24 = vector.broadcast %1 : vector<32x1xf32> to vector<32x256xf32>
    %25 = arith.addf %23, %24 : vector<32x256xf32>
    %cst_19 = arith.constant 0.000000e+00 : f32
    %26 = vector.broadcast %cst_19 : f32 to vector<32x256xf32>
    %27 = arith.maximumf %25, %26 : vector<32x256xf32>
    %cst_20 = arith.constant dense<0.000000e+00> : vector<32xf32>
    %28 = vector.multi_reduction <add>, %27, %cst_20 [1] : vector<32x256xf32> to vector<32xf32>
    %29 = vector.shape_cast %28 : vector<32xf32> to vector<32x1xf32>
    %cst_21 = arith.constant 3.906250e-03 : f32
    %30 = vector.broadcast %cst_21 : f32 to vector<32x1xf32>
    %31 = arith.mulf %29, %30 : vector<32x1xf32>
    %32 = vector.broadcast %31 : vector<32x1xf32> to vector<32x128xf32>
    %33 = arith.mulf %32, %2 : vector<32x128xf32>
    %cst_22 = arith.constant dense<0.000000e+00> : vector<128xf32>
    %34 = vector.multi_reduction <add>, %33, %cst_22 [0] : vector<32x128xf32> to vector<128xf32>
    %35 = vector.shape_cast %34 : vector<128xf32> to vector<1x128xf32>
    %36 = arith.addf %35, %3 : vector<1x128xf32>
    %c1_23 = arith.constant 1 : index
    %c0_24 = arith.constant 0 : index
    %37 = vector.load %arg5[%c1_23, %c0_24] : memref<2x128xf32, #tpu.memory_space<vmem>>, vector<1x128xf32>
    tpu.vector_store %arg5[%c1_23, %c0_24], %36 {strides = array<i32>} : memref<2x128xf32, #tpu.memory_space<vmem>>, vector<1x128xf32>,
    return
  }
}

</mosaic_0001>

<llo_original>
// kernel: predict.1
$region0: #{predict.1}
  #allocation0 [shape = 'u32[]', space=smem, size = 0x4, offset = 0x4, fixed_abs, tag = 'smem constant byte address 0x4 - core index']
  #allocation1 [shape = 'u32[72,128]{1,0:T(1,128)}', space=vmem, size = 0x9000, scoped, tag = 'internal scratch']
  %s0 = inlined_call_operand.vmem [shape: bf16[2,36,256], index: 0, kind: input, shape index: {}]
  %s1 = inlined_call_operand.vmem [shape: bf16[32,36], index: 1, kind: input, shape index: {}]
  %s2 = inlined_call_operand.vmem [shape: f32[32,1], index: 2, kind: input, shape index: {}]
  %s3 = inlined_call_operand.vmem [shape: f32[32,128], index: 3, kind: input, shape index: {}]
  %s4 = inlined_call_operand.vmem [shape: f32[1,128], index: 4, kind: input, shape index: {}]
  %s5 = inlined_call_operand.hbm [shape: f32[2,128], index: 5, kind: output, shape index: {}]
  %s6 = sld [smem:[#allocation0]]
  $region30: #{predict.1} parent=0
    _
  %s8 = ssub.s32 1, %s6
  %s9 = scalar_select 0, %s8, %s6
  $region1: #{predict.1} parent=0
    #allocation2 [shape = 'u8[1024]{0}', space=vmem, size = 0x400, scoped, tag = 'output window, operand 0, single buffered']
    #allocation3 [shape = 's32[1]{0}', space=sflag, size = 0x4, scoped, tag = 'scoped memory for predict.1']
    %10 = vsyncpa [#allocation3], 0
    // Predicated region
    $region2: #{predict.1} parent=1 // pred_check
      _
    $region3: #{predict.1} parent=1 // pred_check_branch
      %12 = sbr.rel (0) target = $region5
    $region4: #{predict.1} parent=1 // pred_region
      _
    $region5: #{predict.1} parent=1 // pred_fallthru
      _
    // Predicated region
    $region6: #{predict.1} parent=1 // pred_check
      _
    $region7: #{predict.1} parent=1 // pred_check_branch
      %14 = sbr.rel (0) target = $region9
    $region8: #{predict.1} parent=1 // pred_region
      _
    $region9: #{predict.1} parent=1 // pred_fallthru
      _
    // Predicated region
    $region10: #{predict.1} parent=1 // pred_check
      _
    $region11: #{predict.1} parent=1 // pred_check_branch
      %16 = sbr.rel (0) target = $region13
    $region12: #{predict.1} parent=1 // pred_region
      _
    $region13: #{predict.1} parent=1 // pred_fallthru
      _
    // Predicated region
    $region14: #{predict.1} parent=1 // pred_check
      _
    $region15: #{predict.1} parent=1 // pred_check_branch
      %18 = sbr.rel (0) target = $region17
    $region16: #{predict.1} parent=1 // pred_region
      _
    $region17: #{predict.1} parent=1 // pred_fallthru
      _
    // Predicated region
    $region18: #{predict.1} parent=1 // pred_check
      _
    $region19: #{predict.1} parent=1 // pred_check_branch
      %20 = sbr.rel (0) target = $region21
    $region20: #{predict.1} parent=1 // pred_region
      _
    $region21: #{predict.1} parent=1 // pred_fallthru
      _
    %v22 = vld [vmem:[%s1] sm:$0xf]
    %v23 = vld [vmem:[%s1 + $0x4] sm:$0xf]
    %v24 = vld [vmem:[%s1 + $0x8] sm:$0xf]
    %v25 = vld [vmem:[%s1 + $0xc] sm:$0xf]
    %v26 = vld [vmem:[%s2] sm:$0xff]
    %v27 = vld [vmem:[%s2 + $0x8] sm:$0xff]
    %v28 = vld [vmem:[%s2 + $0x10] sm:$0xff]
    %v29 = vld [vmem:[%s2 + $0x18] sm:$0xff]
    %v30 = vld [vmem:[%s3] sm:$0xff]
    %v31 = vld [vmem:[%s3 + $0x8] sm:$0xff]
    %v32 = vld [vmem:[%s3 + $0x10] sm:$0xff]
    %v33 = vld [vmem:[%s3 + $0x18] sm:$0xff]
    %v34 = vld [vmem:[%s4] sm:$0x1]
    %v35 = vld [vmem:[%s0] sm:$0xff]
    %v36 = vld [vmem:[%s0 + $0x8] sm:$0xff]
    %v37 = vld [vmem:[%s0 + $0x10] sm:$0xff]
    %v38 = vld [vmem:[%s0 + $0x18] sm:$0xff]
    %v39 = vld [vmem:[%s0 + $0x20] sm:$0x33]
    %41 = vset.pattern.permute.xlu0 0
    %42 = vperm.xlu0 %41, %v26
    %v43 = vpop.permute.xlu0 %42
    %46 = vset.pattern.permute.xlu0 0
    %47 = vperm.xlu0 %46, %v27
    %v48 = vpop.permute.xlu0 %47
    %51 = vset.pattern.permute.xlu0 0
    %52 = vperm.xlu0 %51, %v28
    %v53 = vpop.permute.xlu0 %52
    %56 = vset.pattern.permute.xlu0 0
    %57 = vperm.xlu0 %56, %v29
    %v58 = vpop.permute.xlu0 %57
    %v64 = vunpack.c.l.b16 %v22
    %v65 = vunpack.c.l.b16 %v23
    %v66 = vunpack.c.l.b16 %v24
    %v67 = vunpack.c.l.b16 %v25
    %v68 = vpack.c.b16 %v65, %v64
    %v69 = vpack.c.b16 %v67, %v66
    %v75 = vunpack.c.l.b16 %v35
    %v76 = vunpack.c.h.b16 %v35
    %v77 = vunpack.c.l.b16 %v36
    %v78 = vunpack.c.h.b16 %v36
    %v79 = vunpack.c.l.b16 %v37
    %v80 = vunpack.c.h.b16 %v37
    %v81 = vunpack.c.l.b16 %v38
    %v82 = vunpack.c.h.b16 %v38
    %v83 = vunpack.c.l.b16 %v39
    %v84 = vunpack.c.h.b16 %v39
    %v85 = vpack.c.b16 %v77, %v75
    %v86 = vpack.c.b16 %v78, %v76
    %v87 = vpack.c.b16 %v81, %v79
    %v88 = vpack.c.b16 %v82, %v80
    %v89 = vpack.c.b16 %v83, %v83
    %v90 = vpack.c.b16 %v84, %v84
    %vm95 = vcmask 293888
    %v97 = vsel %vm95, %v68, 0
    %v100 = vsel %vm95, %v69, 0
    %vm102 = vcmask 1041408
    %v104 = vsel %vm102, %v89, 0
    %v107 = vsel %vm102, %v90, 0
    %109 = vmatpush.bf16.msra.mxu0 0
    %110 = vmatpush.bf16.msra.mxu0 0
    %111 = vmatpush.bf16.msra.mxu0 0
    %112 = vmatpush.bf16.msra.mxu0 0
    %113 = vmatpush.bf16.msra.mxu0 0
    %114 = vmatpush.bf16.msra.mxu0 %v104
    %115 = vmatpush.bf16.msra.mxu0 %v87
    %116 = vmatpush.bf16.msra.mxu0 %v85
    %117 = vmatmul.bf16.gmra.mxu0 %v97
    %v118 = vpop.f32.mrf.mxu0
    %v119 = vadd.f32 %v43, %v118
    %v120 = vpop.f32.mrf.mxu0
    %v121 = vadd.f32 %v48, %v120
    %122 = vmatmul.bf16.gmra.mxu0 %v100
    %v123 = vpop.f32.mrf.mxu0
    %v124 = vadd.f32 %v53, %v123
    %v125 = vpop.f32.mrf.mxu0
    %v126 = vadd.f32 %v58, %v125
    %127 = vdwg.mxu0
    %128 = vmatpush.bf16.msra.mxu0 0
    %129 = vmatpush.bf16.msra.mxu0 0
    %130 = vmatpush.bf16.msra.mxu0 0
    %131 = vmatpush.bf16.msra.mxu0 0
    %132 = vmatpush.bf16.msra.mxu0 0
    %133 = vmatpush.bf16.msra.mxu0 %v107
    %134 = vmatpush.bf16.msra.mxu0 %v88
    %135 = vmatpush.bf16.msra.mxu0 %v86
    %136 = vmatmul.bf16.gmra.mxu0 %v97
    %v137 = vpop.f32.mrf.mxu0
    %v138 = vadd.f32 %v43, %v137
    %v139 = vpop.f32.mrf.mxu0
    %v140 = vadd.f32 %v48, %v139
    %141 = vmatmul.bf16.gmra.mxu0 %v100
    %v142 = vpop.f32.mrf.mxu0
    %v143 = vadd.f32 %v53, %v142
    %v144 = vpop.f32.mrf.mxu0
    %v145 = vadd.f32 %v58, %v144
    %146 = vdwg.mxu0
    %v147 = vmax.f32 %v119, 0.0
    %v148 = vmax.f32 %v138, 0.0
    %v149 = vmax.f32 %v121, 0.0
    %v150 = vmax.f32 %v140, 0.0
    %v151 = vmax.f32 %v124, 0.0
    %v152 = vmax.f32 %v143, 0.0
    %v153 = vmax.f32 %v126, 0.0
    %v154 = vmax.f32 %v145, 0.0
    %v155 = vadd.f32 %v147, %v148
    %156 = vadd.xlane.f32.xlu0 %v155
    %v157 = vpop.xlane.xlu0 %156
    %v158 = vadd.f32 %v149, %v150
    %159 = vadd.xlane.f32.xlu0 %v158
    %v160 = vpop.xlane.xlu0 %159
    %v161 = vadd.f32 %v151, %v152
    %162 = vadd.xlane.f32.xlu0 %v161
    %v163 = vpop.xlane.xlu0 %162
    %v164 = vadd.f32 %v153, %v154
    %165 = vadd.xlane.f32.xlu0 %v164
    %v166 = vpop.xlane.xlu0 %165
    %v167 = vmul.f32 %v157, 0.00390625
    %v168 = vmul.f32 %v160, 0.00390625
    %v169 = vmul.f32 %v163, 0.00390625
    %v170 = vmul.f32 %v166, 0.00390625
    %v171 = vmul.f32 %v167, %v30
    %v172 = vmul.f32 %v168, %v31
    %v173 = vmul.f32 %v169, %v32
    %v174 = vmul.f32 %v170, %v33
    %v175 = vadd.f32 %v171, %v172
    %v176 = vadd.f32 %v175, %v173
    %v177 = vadd.f32 %v176, %v174
    %v178 = vrot.slane %v177, 4
    %v179 = vadd.f32 %v177, %v178
    %v180 = vrot.slane %v179, 2
    %v181 = vadd.f32 %v179, %v180
    %v182 = vrot.slane %v181, 1
    %v183 = vadd.f32 %v181, %v182
    %v184 = vadd.f32 %v183, %v34
    %185 = vst [vmem:[#allocation2] sm:$0x1] %v184
    %s186 = scalar_lea.vmem %s0, 40
    %v187 = vld [vmem:[%s186] sm:$0xff]
    %v188 = vld [vmem:[%s186 + $0x8] sm:$0xff]
    %v189 = vld [vmem:[%s186 + $0x10] sm:$0xff]
    %v190 = vld [vmem:[%s186 + $0x18] sm:$0xff]
    %v191 = vld [vmem:[%s186 + $0x20] sm:$0x33]
    %v197 = vunpack.c.l.b16 %v187
    %v198 = vunpack.c.h.b16 %v187
    %v199 = vunpack.c.l.b16 %v188
    %v200 = vunpack.c.h.b16 %v188
    %v201 = vunpack.c.l.b16 %v189
    %v202 = vunpack.c.h.b16 %v189
    %v203 = vunpack.c.l.b16 %v190
    %v204 = vunpack.c.h.b16 %v190
    %v205 = vunpack.c.l.b16 %v191
    %v206 = vunpack.c.h.b16 %v191
    %v207 = vpack.c.b16 %v199, %v197
    %v208 = vpack.c.b16 %v200, %v198
    %v209 = vpack.c.b16 %v203, %v201
    %v210 = vpack.c.b16 %v204, %v202
    %v211 = vpack.c.b16 %v205, %v205
    %v212 = vpack.c.b16 %v206, %v206
    %v218 = vsel %vm102, %v211, 0
    %v221 = vsel %vm102, %v212, 0
    %223 = vmatpush.bf16.msra.mxu0 0
    %224 = vmatpush.bf16.msra.mxu0 0
    %225 = vmatpush.bf16.msra.mxu0 0
    %226 = vmatpush.bf16.msra.mxu0 0
    %227 = vmatpush.bf16.msra.mxu0 0
    %228 = vmatpush.bf16.msra.mxu0 %v218
    %229 = vmatpush.bf16.msra.mxu0 %v209
    %230 = vmatpush.bf16.msra.mxu0 %v207
    %231 = vmatmul.bf16.gmra.mxu0 %v97
    %v232 = vpop.f32.mrf.mxu0
    %v233 = vadd.f32 %v43, %v232
    %v234 = vpop.f32.mrf.mxu0
    %v235 = vadd.f32 %v48, %v234
    %236 = vmatmul.bf16.gmra.mxu0 %v100
    %v237 = vpop.f32.mrf.mxu0
    %v238 = vadd.f32 %v53, %v237
    %v239 = vpop.f32.mrf.mxu0
    %v240 = vadd.f32 %v58, %v239
    %241 = vdwg.mxu0
    %242 = vmatpush.bf16.msra.mxu0 0
    %243 = vmatpush.bf16.msra.mxu0 0
    %244 = vmatpush.bf16.msra.mxu0 0
    %245 = vmatpush.bf16.msra.mxu0 0
    %246 = vmatpush.bf16.msra.mxu0 0
    %247 = vmatpush.bf16.msra.mxu0 %v221
    %248 = vmatpush.bf16.msra.mxu0 %v210
    %249 = vmatpush.bf16.msra.mxu0 %v208
    %250 = vmatmul.bf16.gmra.mxu0 %v97
    %v251 = vpop.f32.mrf.mxu0
    %v252 = vadd.f32 %v43, %v251
    %v253 = vpop.f32.mrf.mxu0
    %v254 = vadd.f32 %v48, %v253
    %255 = vmatmul.bf16.gmra.mxu0 %v100
    %v256 = vpop.f32.mrf.mxu0
    %v257 = vadd.f32 %v53, %v256
    %v258 = vpop.f32.mrf.mxu0
    %v259 = vadd.f32 %v58, %v258
    %260 = vdwg.mxu0
    %v261 = vmax.f32 %v233, 0.0
    %v262 = vmax.f32 %v252, 0.0
    %v263 = vmax.f32 %v235, 0.0
    %v264 = vmax.f32 %v254, 0.0
    %v265 = vmax.f32 %v238, 0.0
    %v266 = vmax.f32 %v257, 0.0
    %v267 = vmax.f32 %v240, 0.0
    %v268 = vmax.f32 %v259, 0.0
    %v269 = vadd.f32 %v261, %v262
    %270 = vadd.xlane.f32.xlu0 %v269
    %v271 = vpop.xlane.xlu0 %270
    %v272 = vadd.f32 %v263, %v264
    %273 = vadd.xlane.f32.xlu0 %v272
    %v274 = vpop.xlane.xlu0 %273
    %v275 = vadd.f32 %v265, %v266
    %276 = vadd.xlane.f32.xlu0 %v275
    %v277 = vpop.xlane.xlu0 %276
    %v278 = vadd.f32 %v267, %v268
    %279 = vadd.xlane.f32.xlu0 %v278
    %v280 = vpop.xlane.xlu0 %279
    %v281 = vmul.f32 %v271, 0.00390625
    %v282 = vmul.f32 %v274, 0.00390625
    %v283 = vmul.f32 %v277, 0.00390625
    %v284 = vmul.f32 %v280, 0.00390625
    %v285 = vmul.f32 %v281, %v30
    %v286 = vmul.f32 %v282, %v31
    %v287 = vmul.f32 %v283, %v32
    %v288 = vmul.f32 %v284, %v33
    %v289 = vadd.f32 %v285, %v286
    %v290 = vadd.f32 %v289, %v287
    %v291 = vadd.f32 %v290, %v288
    %v292 = vrot.slane %v291, 4
    %v293 = vadd.f32 %v291, %v292
    %v294 = vrot.slane %v293, 2
    %v295 = vadd.f32 %v293, %v294
    %v296 = vrot.slane %v295, 1
    %v297 = vadd.f32 %v295, %v296
    %v298 = vadd.f32 %v297, %v34
    %299 = vst [vmem:[#allocation2 + $0x1] sm:$0x1] %v298
    // Predicated region
    $region22: #{predict.1} parent=1 // pred_check
      _
    $region23: #{predict.1} parent=1 // pred_check_branch
      %301 = sbr.rel (0) target = $region25
    $region24: #{predict.1} parent=1 // pred_region
      %303 = vsyncadd [#allocation3], 0
      %s305 = sshll.u32 [#allocation2], 4
      %s306 = int_to_ptr.vmem [resolvable:$true] %s305
      %s307 = sshll.u32 %s5, 4
      %s308 = int_to_ptr.hbm [resolvable:$true] %s307
      %310 = dma.vmem_to_hbm [thread:$0]  %s306, 32, %s308, [#allocation3]
    $region25: #{predict.1} parent=1 // pred_fallthru
      _
    // Predicated region
    $region26: #{predict.1} parent=1 // pred_check
      _
    $region27: #{predict.1} parent=1 // pred_check_branch
      %312 = sbr.rel (0) target = $region29
    $region28: #{predict.1} parent=1 // pred_region
      %314 = dma.done [#allocation3], 32
    $region29: #{predict.1} parent=1 // pred_fallthru
      _
    %315 = vsyncpa [#allocation3], 1

</llo_original>
